<compile_context>
chip_gen: v7x
topology: tpu7x:2x2x1
jax: 0.10.0
libtpu: 0.0.40
codegen_flags: <defaults>
</compile_context>

<pallas_src>
import math

import jax
import jax.numpy as jnp
from jax.experimental import pallas as pl
from jax.experimental.pallas import tpu as pltpu


def _round_up(a, m):
    return ((a + m - 1) // m) * m


def _pick_batch_block(b, c_pad, elem_bytes, request=None, cap=8):
    """Largest divisor of B (<= cap) that keeps >= 2 batch blocks when B >= 2
    and keeps a minimal (Bt, C_pad, 128) tile under a few MiB."""
    limit = 4 << 20
    cands = [bt for bt in range(1, min(cap, b) + 1)
             if b % bt == 0 and bt * c_pad * 128 * elem_bytes <= limit]
    if not cands:
        return 1
    if request is not None:
        req = max(1, min(int(request), b))
        ok = [bt for bt in cands if bt <= req]
        return max(ok) if ok else 1
    pref = [bt for bt in cands if b // bt >= 2]
    return max(pref) if pref else max(cands)


def _x_block_spec(block_shape, index_map, depth):
    """x BlockSpec, requesting `depth`-deep pipelining when asked (guarded so
    older BlockSpec signatures fall back to the default double-buffering)."""
    if depth > 2 and hasattr(pl, "Buffered"):
        try:
            return pl.BlockSpec(block_shape, index_map,
                                pipeline_mode=pl.Buffered(depth))
        except TypeError:
            pass
    return pl.BlockSpec(block_shape, index_map)


def _make_cwff_kernel(hw, thw, num_k, needs_mask):
    """Kernel body.

    x_ref : (Bt, C_in, thw)   tile of Bt batch rows
    w1_ref: (C_in, H1)        fc1 weight (transposed), VMEM-resident
    w2_ref: (H1, C_out)       fc2 weight (transposed), VMEM-resident
    b_ref : (1, C_out)        fc2 bias, VMEM-resident
    o_ref : (Bt, 1, C_out)    per batch-block output, written once
    acc   : (Bt, C_in, 128)   f32 lane-aligned partial sums (only if num_k>1)
    """
    inv_hw = 1.0 / float(hw)
    lanes = 128
    n_chunks = thw // lanes if num_k > 1 else 0
    tail = hw - (num_k - 1) * thw          # valid lanes in the last tile

    def _fcs_and_store(pooled, w1_ref, w2_ref, b_ref, o_ref):
        # pooled: (Bt, C_in) f32.  Tiny MXU matmuls with M=Bt (not M=1).
        h = jnp.dot(pooled, w1_ref[...].astype(jnp.float32),
                    preferred_element_type=jnp.float32)          # (Bt, H1)
        h = jnp.maximum(h, 0.0)                                   # ReLU
        out = jnp.dot(h, w2_ref[...].astype(jnp.float32),
                      preferred_element_type=jnp.float32)         # (Bt, C_out)
        out = out + b_ref[...].astype(jnp.float32)                # bias
        o_ref[...] = out[:, None, :].astype(o_ref.dtype)          # (Bt,1,C_out)

    def kernel(x_ref, w1_ref, w2_ref, b_ref, o_ref, *scratch):
        if num_k == 1:
            # Whole H*W fits in one tile: reduce directly, no accumulator.
            tile = x_ref[...].astype(jnp.float32)
            pooled = jnp.sum(tile, axis=-1) * inv_hw              # (Bt, C_in)
            _fcs_and_store(pooled, w1_ref, w2_ref, b_ref, o_ref)
            return

        (acc_ref,) = scratch
        k = pl.program_id(1)

        @pl.when(k == 0)
        def _init():
            acc_ref[...] = jnp.zeros_like(acc_ref)

        def _accum(n_valid):
            # Elementwise-add 128-lane chunks into the lane-aligned f32
            # accumulator: pure VPU adds in the hot loop, no per-step
            # cross-lane reduce and no sublane->lane relayout.
            t = x_ref[...]
            partial = None
            for c in range(n_chunks):
                lo = c * lanes
                if lo >= n_valid:          # fully padded chunk: skip (static)
                    break
                chunk = t[:, :, lo:lo + lanes].astype(jnp.float32)
                if lo + lanes > n_valid:   # boundary chunk of the ragged tail
                    lane = jax.lax.broadcasted_iota(jnp.int32, chunk.shape, 2)
                    chunk = jnp.where(lane < (n_valid - lo), chunk, 0.0)
                partial = chunk if partial is None else partial + chunk
            acc_ref[...] += partial

        if needs_mask:
            # Steady state stays mask-free; the iota/select runs once per row.
            @pl.when(k < num_k - 1)
            def _accum_body():
                _accum(thw)

            @pl.when(k == num_k - 1)
            def _accum_tail():
                _accum(tail)
        else:
            _accum(thw)

        @pl.when(k == num_k - 1)
        def _finalize():
            # Single cross-lane reduce + scale + FCs, once per batch block.
            pooled = jnp.sum(acc_ref[...], axis=-1) * inv_hw      # (Bt, C_in)
            _fcs_and_store(pooled, w1_ref, w2_ref, b_ref, o_ref)

    return kernel


def cwff_forward(x, w1, w2, b2, *, max_lanes=None, batch_block=None,
                 vmem_limit_bytes=None):
    """x: (B, C_in, H, W); w1: (H1, C_in); w2: (C_out, H1); b2: (C_out,)."""
    B, C_in, H, W = x.shape
    H1 = w1.shape[0]
    C_out = w2.shape[0]
    HW = H * W

    elem = jnp.dtype(x.dtype).itemsize
    sublane = {4: 8, 2: 16, 1: 32}.get(elem, 8)
    C_pad = _round_up(C_in, sublane)            # real VMEM sublane footprint

    # ---- batch blocking (exact divisor of B, keeps >= 2 parallel blocks) ---
    Bt = _pick_batch_block(B, C_pad, elem, request=batch_block)
    nb = B // Bt

    # ---- spatial tiling ----------------------------------------------------
    # Cap each x buffer at ~2 MiB: larger tiles buy no HBM bandwidth and only
    # add VMEM pressure (matters most on v7x's 64 MiB/TC VMEM).
    tile_cap = 2 << 20
    max_thw = max(128, ((tile_cap // (Bt * C_pad * elem)) // 128) * 128)
    if max_lanes is not None:
        max_thw = max(128, (int(max_lanes) // 128) * 128)
    if HW <= max_thw:
        thw, num_k = HW, 1
    else:
        thw, num_k = max_thw, -(-HW // max_thw)
    needs_mask = (HW % thw) != 0
    assert num_k == 1 or thw % 128 == 0

    # Deeper x pipelining when there are enough reduction steps to hide the
    # per-row finalize bubble; otherwise default double buffering.
    buf_depth = 3 if num_k >= 3 else 2

    # ---- VMEM budget (accounts for sublane/lane padding of every buffer) ---
    try:
        vmem_cap = pltpu.get_tpu_info().vmem_capacity_bytes
    except Exception:
        vmem_cap = 64 * 1024 * 1024             # conservative (v7x per-core)
    if vmem_limit_bytes is None:
        x_buf = Bt * C_pad * _round_up(thw, 128) * elem
        acc_b = Bt * C_pad * 128 * 4 if num_k > 1 else 0
        w_b = 4 * (_round_up(C_in, 8) * _round_up(H1, 128)
                   + _round_up(H1, 8) * _round_up(C_out, 128)
                   + 8 * _round_up(C_out, 128))
        o_b = Bt * 8 * _round_up(C_out, 128) * 4
        est = buf_depth * x_buf + acc_b + 2 * w_b + 2 * o_b + (2 << 20)
        vmem_limit_bytes = int(min(max(est, 16 << 20), 0.45 * vmem_cap))

    # ---- layout plumbing (outside the kernel) ------------------------------
    x3 = x.reshape(B, C_in, HW)
    w1_t = jnp.transpose(w1)                    # (C_in, H1)
    w2_t = jnp.transpose(w2)                    # (H1, C_out)
    b_row = b2.reshape(1, C_out)

    kernel = _make_cwff_kernel(HW, thw, num_k, needs_mask)
    scratch = [pltpu.VMEM((Bt, C_in, 128), jnp.float32)] if num_k > 1 else []

    def _run(depth):
        return pl.pallas_call(
            kernel,
            out_shape=jax.ShapeDtypeStruct((B, 1, C_out), x.dtype),
            grid_spec=pltpu.PrefetchScalarGridSpec(
                num_scalar_prefetch=0,
                grid=(nb, num_k),
                in_specs=[
                    _x_block_spec((Bt, C_in, thw), lambda b, k: (b, 0, k), depth),
                    pl.BlockSpec((C_in, H1), lambda b, k: (0, 0)),
                    pl.BlockSpec((H1, C_out), lambda b, k: (0, 0)),
                    pl.BlockSpec((1, C_out), lambda b, k: (0, 0)),
                ],
                out_specs=pl.BlockSpec((Bt, 1, C_out), lambda b, k: (b, 0, 0)),
                scratch_shapes=scratch,
            ),
            compiler_params=pltpu.CompilerParams(
                dimension_semantics=("parallel", "arbitrary"),
                vmem_limit_bytes=vmem_limit_bytes,
            ),
        )(x3, w1_t, w2_t, b_row)

    if buf_depth > 2:
        try:
            out = _run(buf_depth)
        except Exception:       # fall back to default double buffering
            out = _run(2)
    else:
        out = _run(2)

    # nn.Conv2d on a 1x1 feature map returns (B, C_out, 1, 1)
    return out.reshape(B, C_out, 1, 1)


def init_cwff_params(key, in_planes, out_planes, ratios=1.0, dtype=jnp.float32):
    """Deterministic init mirroring kaiming_normal_(mode='fan_out', relu)."""
    hidden_planes = int(in_planes * ratios)
    k1, k2 = jax.random.split(key)

    # fc1: Conv2d(in_planes, hidden, 1, bias=False); fan_out = hidden * 1 * 1
    std1 = math.sqrt(2.0 / hidden_planes)
    w1 = std1 * jax.random.normal(k1, (hidden_planes, in_planes), dtype=dtype)

    # fc2: Conv2d(hidden, out_planes, 1, bias=True); fan_out = out_planes
    std2 = math.sqrt(2.0 / out_planes)
    w2 = std2 * jax.random.normal(k2, (out_planes, hidden_planes), dtype=dtype)
    b2 = jnp.zeros((out_planes,), dtype=dtype)
    return w1, w2, b2


def _reference(x, w1, w2, b2):
    pooled = jnp.mean(x, axis=(2, 3))                 # (B, C_in)
    h = jnp.maximum(pooled @ w1.T, 0.0)               # (B, H1)
    return (h @ w2.T + b2).reshape(x.shape[0], w2.shape[0], 1, 1)


if __name__ == "__main__":
    key = jax.random.PRNGKey(0)

    # ---- Test 1: module-sized shapes; single spatial tile, batch split into
    #              2 parallel blocks (one per v7x TensorCore). -----------------
    k1, k2, key = jax.random.split(key, 3)
    B, C_in, H, W = 2, 4, 16, 16
    out_planes, ratios = 8, 1.0
    x = jax.random.normal(k1, (B, C_in, H, W), dtype=jnp.float32)
    w1, w2, b2 = init_cwff_params(k2, C_in, out_planes, ratios)
    y = jax.block_until_ready(cwff_forward(x, w1, w2, b2))
    ref = _reference(x, w1, w2, b2)
    assert y.shape == ref.shape
    assert jnp.allclose(y, ref, atol=1e-5, rtol=1e-5)

    # ---- Test 2: multi-tile ragged H*W reduction (thw=128, 3 steps, masked
    #              tail), batch blocking with Bt=2, non-zero bias. -------------
    k3, k4, k5, key = jax.random.split(key, 4)
    B, C_in, H, W = 4, 5, 10, 33                      # HW = 330 = 2*128 + 74
    out_planes, ratios = 6, 2.0
    x = jax.random.normal(k3, (B, C_in, H, W), dtype=jnp.float32)
    w1, w2, _ = init_cwff_params(k4, C_in, out_planes, ratios)
    b2 = 0.1 * jax.random.normal(k5, (out_planes,), dtype=jnp.float32)
    y = jax.block_until_ready(cwff_forward(x, w1, w2, b2, max_lanes=128))
    ref = _reference(x, w1, w2, b2)
    assert y.shape == ref.shape
    assert jnp.allclose(y, ref, atol=1e-5, rtol=1e-5)

    print("KERNEL_OK")
</pallas_src>

<mosaic_0001>
module attributes {stable_mosaic.version = 11 : i64} {
  func.func @kernel(%arg0: i32, %arg1: i32, %arg2: memref<1x4x256xf32, #tpu.memory_space<vmem>>, %arg3: memref<4x4xf32, #tpu.memory_space<vmem>>, %arg4: memref<4x8xf32, #tpu.memory_space<vmem>>, %arg5: memref<1x8xf32, #tpu.memory_space<vmem>>, %arg6: memref<1x1x8xf32, #tpu.memory_space<vmem>>) attributes {dimension_semantics = [#tpu.dimension_semantics<parallel>, #tpu.dimension_semantics<arbitrary>], iteration_bounds = array<i64: 2, 1>, scalar_prefetch = 0 : i64, scratch_operands = 0 : i64, tpu.core_type = #tpu.core_type<tc>, window_params = [{transform_indices = @transform_0, window_bounds = array<i64: 1, 4, 256>}, {pipeline_mode = #tpu.pipeline_mode<synchronous>, transform_indices = @transform_1, window_bounds = array<i64: 4, 4>}, {pipeline_mode = #tpu.pipeline_mode<synchronous>, transform_indices = @transform_2, window_bounds = array<i64: 4, 8>}, {pipeline_mode = #tpu.pipeline_mode<synchronous>, transform_indices = @transform_3, window_bounds = array<i64: 1, 8>}, {transform_indices = @transform_4, window_bounds = array<i64: 1, 1, 8>}]} {
    %c0 = arith.constant 0 : index
    %c0_0 = arith.constant 0 : index
    %c0_1 = arith.constant 0 : index
    %0 = vector.load %arg2[%c0, %c0_0, %c0_1] : memref<1x4x256xf32, #tpu.memory_space<vmem>>, vector<1x4x256xf32>
    %cst = arith.constant dense<0.000000e+00> : vector<1x4xf32>
    %1 = vector.multi_reduction <add>, %0, %cst [2] : vector<1x4x256xf32> to vector<1x4xf32>
    %cst_2 = arith.constant 3.906250e-03 : f32
    %2 = vector.broadcast %cst_2 : f32 to vector<1x4xf32>
    %3 = arith.mulf %1, %2 : vector<1x4xf32>
    %c0_3 = arith.constant 0 : index
    %c0_4 = arith.constant 0 : index
    %4 = vector.load %arg3[%c0_3, %c0_4] : memref<4x4xf32, #tpu.memory_space<vmem>>, vector<4x4xf32>
    %cst_5 = arith.constant dense<0.000000e+00> : vector<1x4xf32>
    %5 = tpu.matmul %3, %4, %cst_5 {dimension_numbers = #tpu.dot_dimension_numbers<[1], [0], [0], [1], [0, 0, 1, 1], [], []>} : vector<1x4xf32>, vector<4x4xf32>, vector<1x4xf32> -> vector<1x4xf32>
    %cst_6 = arith.constant 0.000000e+00 : f32
    %6 = vector.broadcast %cst_6 : f32 to vector<1x4xf32>
    %7 = arith.maximumf %5, %6 : vector<1x4xf32>
    %c0_7 = arith.constant 0 : index
    %c0_8 = arith.constant 0 : index
    %8 = vector.load %arg4[%c0_7, %c0_8] : memref<4x8xf32, #tpu.memory_space<vmem>>, vector<4x8xf32>
    %cst_9 = arith.constant dense<0.000000e+00> : vector<1x8xf32>
    %9 = tpu.matmul %7, %8, %cst_9 {dimension_numbers = #tpu.dot_dimension_numbers<[1], [0], [0], [1], [0, 0, 1, 1], [], []>} : vector<1x4xf32>, vector<4x8xf32>, vector<1x8xf32> -> vector<1x8xf32>
    %c0_10 = arith.constant 0 : index
    %c0_11 = arith.constant 0 : index
    %10 = vector.load %arg5[%c0_10, %c0_11] : memref<1x8xf32, #tpu.memory_space<vmem>>, vector<1x8xf32>
    %11 = arith.addf %9, %10 : vector<1x8xf32>
    %12 = vector.shape_cast %11 : vector<1x8xf32> to vector<1x1x8xf32>
    %c0_12 = arith.constant 0 : index
    %c0_13 = arith.constant 0 : index
    %c0_14 = arith.constant 0 : index
    %13 = vector.load %arg6[%c0_12, %c0_13, %c0_14] : memref<1x1x8xf32, #tpu.memory_space<vmem>>, vector<1x1x8xf32>
    tpu.vector_store %arg6[%c0_12, %c0_13, %c0_14], %12 {strides = array<i32>} : memref<1x1x8xf32, #tpu.memory_space<vmem>>, vector<1x1x8xf32>,
    return
  }
  func.func @transform_0(%arg0: i32, %arg1: i32) -> (i32, i32, i32) {
    %c0_i32 = arith.constant 0 : i32
    %c0_i32_0 = arith.constant 0 : i32
    return %arg0, %c0_i32, %arg1 : i32, i32, i32
  }
  func.func @transform_1(%arg0: i32, %arg1: i32) -> (i32, i32) {
    %c0_i32 = arith.constant 0 : i32
    %c0_i32_0 = arith.constant 0 : i32
    %c0_i32_1 = arith.constant 0 : i32
    return %c0_i32, %c0_i32_0 : i32, i32
  }
  func.func @transform_2(%arg0: i32, %arg1: i32) -> (i32, i32) {
    %c0_i32 = arith.constant 0 : i32
    %c0_i32_0 = arith.constant 0 : i32
    %c0_i32_1 = arith.constant 0 : i32
    return %c0_i32, %c0_i32_0 : i32, i32
  }
  func.func @transform_3(%arg0: i32, %arg1: i32) -> (i32, i32) {
    %c0_i32 = arith.constant 0 : i32
    %c0_i32_0 = arith.constant 0 : i32
    %c0_i32_1 = arith.constant 0 : i32
    return %c0_i32, %c0_i32_0 : i32, i32
  }
  func.func @transform_4(%arg0: i32, %arg1: i32) -> (i32, i32, i32) {
    %c0_i32 = arith.constant 0 : i32
    %c0_i32_0 = arith.constant 0 : i32
    %c0_i32_1 = arith.constant 0 : i32
    return %arg0, %c0_i32, %c0_i32_0 : i32, i32, i32
  }
}

</mosaic_0001>

<llo_original>
// kernel: tpu_custom_call.1
$region0: #{tpu_custom_call.1}
  #allocation0 [shape = 'u32[]', space=smem, size = 0x4, offset = 0x4, fixed_abs, tag = 'smem constant byte address 0x4 - core index']
  #allocation1 [shape = 'u32[144,128]{1,0:T(1,128)}', space=vmem, size = 0x12000, scoped, tag = 'internal scratch']
  %s0 = inlined_call_operand.hbm [shape: f32[2,4,256], index: 0, kind: input, shape index: {}]
  %s1 = inlined_call_operand.hbm [shape: f32[4,4], index: 1, kind: input, shape index: {}]
  %s2 = inlined_call_operand.vmem [shape: f32[4,8], index: 2, kind: input, shape index: {}]
  %s3 = inlined_call_operand.vmem [shape: f32[1,8], index: 3, kind: input, shape index: {}]
  %s4 = inlined_call_operand.hbm [shape: f32[2,1,8], index: 4, kind: output, shape index: {}]
  %s5 = sld [smem:[#allocation0]]
  $region57: #{tpu_custom_call.1} parent=0
    _
  %s7 = ssub.s32 1, %s5
  %s8 = scalar_select 0, %s7, %s5
  $region1: #{tpu_custom_call.1} parent=0
    #allocation2 [shape = 'u8[8192]{0}', space=vmem, size = 0x2000, scoped, tag = 'input window, operand 0']
    #allocation3 [shape = 's32[2]{0}', space=sflag, size = 0x8, scoped, tag = 'scoped memory for tpu_custom_call.1']
    #allocation4 [shape = 's32[2]{0}', space=sflag, size = 0x8, scoped, tag = 'scoped memory for tpu_custom_call.1']
    #allocation5 [shape = 'u8[2048]{0}', space=vmem, size = 0x800, scoped, tag = 'input window, operand 1, single buffered']
    #allocation6 [shape = 's32[1]{0}', space=sflag, size = 0x4, scoped, tag = 'scoped memory for tpu_custom_call.1']
    #allocation7 [shape = 'u8[1024]{0}', space=vmem, size = 0x400, scoped, tag = 'output window, operand 0']
    %9 = vsyncpa [#allocation3], 0
    %s10 = scalar_lea.sflag [#allocation3], 1
    %11 = vsyncpa %s10, 0
    %12 = vsyncpa [#allocation6], 0
    %13 = vsyncpa [#allocation4], 0
    %s14 = scalar_lea.sflag [#allocation4], 1
    %15 = vsyncpa %s14, 0
    loop: start=0, step=1, limit=4
    $region2: #{tpu_custom_call.1} parent=1 // loop_pre_header
      _
    $region3: #{tpu_custom_call.1} parent=1 // loop_header
      %s17 = sphi 0, %s21
      %p18 = scmp.ge.s32.totalorder %s17, 4
      %s24 = sphi 0, %s36
      %s25 = sphi 0, %s32
      %s26 = sphi 0, %s24
      %s27 = sphi 0, %s25
      %s28 = sphi 0, %s26
      %s29 = sphi 0, %s27
      %s41 = sphi 0, %s43
      %s44 = sphi 0, %s41
      %s45 = sphi 0, %s44
      %s61 = sphi 0, %s45
      %s65 = sphi 0, %s65
      %s67 = sphi 0, %s65
      %s68 = sphi 0, %s67
      %s82 = sphi 0, %s68
      %s86 = sphi 0, %s86
      %s88 = sphi 0, %s86
      %s89 = sphi 0, %s88
      %s103 = sphi 0, %s89
      %s107 = sphi 0, %s107
      %s109 = sphi 0, %s107
      %s110 = sphi 0, %s109
      %s124 = sphi 0, %s110
      %s130 = sphi 0, %s132
      %s133 = sphi 0, %s130
      %s134 = sphi 0, %s133
      %s150 = sphi 0, %s134
    $region4: #{tpu_custom_call.1} parent=1 // loop_header_branch
      %20 = sbr.rel (%p18) target = $region8
    $region5: #{tpu_custom_call.1} parent=1 // loop_body
      %s22 = ssub.s32 %s17, 1
      %s23 = ssub.s32 %s17, 2
      %s30 = sadd.s32 1, %s25
      %p31 = scmp.ge.s32.totalorder %s30, 1
      %s32 = scalar_select %p31, 0, %s30
      %s33 = sadd.s32 1, %s24
      %s34 = scalar_select %p31, %s33, %s24
      %p35 = scmp.ge.s32.totalorder %s34, 2
      %s36 = scalar_select %p35, 0, %s34
      %s37 = ssub.s32 %s24, %s36
      %s38 = ssub.s32 %s25, %s32
      %s39 = sor.u32 %s37, %s38
      %p40 = scmp.eq.s32.totalorder %s39, 0
      %s42 = sadd.s32 %s41, 1
      %s43 = scalar_select %p40, %s41, %s42
      %p46 = pneg %p40
      %p47 = scmp.eq.s32.totalorder %s17, 1
      %p48 = por %p46, %p47
      %p49 = scmp.ne.s32.totalorder %s41, %s44
      %p50 = scmp.eq.s32.totalorder %s17, 0
      %p51 = por %p49, %p50
      %p52 = scmp.ne.s32.totalorder %s41, %s44
      %p53 = scmp.eq.s32.totalorder %s22, 1
      %p54 = por %p52, %p53
      %p55 = scmp.ne.s32.totalorder %s44, %s45
      %p56 = scmp.eq.s32.totalorder %s22, 0
      %p57 = por %p55, %p56
      %p58 = scmp.ne.s32.totalorder %s44, %s45
      %p59 = scmp.eq.s32.totalorder %s23, 1
      %p60 = por %p58, %p59
      %p62 = scmp.ne.s32.totalorder %s45, %s61
      %p63 = scmp.eq.s32.totalorder %s23, 0
      %p64 = por %p62, %p63
      %s66 = sadd.s32 %s65, 1
      %p69 = scmp.eq.s32.totalorder %s17, 1
      %p70 = scmp.ne.s32.totalorder %s65, %s67
      %p71 = scmp.eq.s32.totalorder %s17, 0
      %p72 = por %p70, %p71
      %p73 = scmp.ne.s32.totalorder %s65, %s67
      %p74 = scmp.eq.s32.totalorder %s22, 1
      %p75 = por %p73, %p74
      %p76 = scmp.ne.s32.totalorder %s67, %s68
      %p77 = scmp.eq.s32.totalorder %s22, 0
      %p78 = por %p76, %p77
      %p79 = scmp.ne.s32.totalorder %s67, %s68
      %p80 = scmp.eq.s32.totalorder %s23, 1
      %p81 = por %p79, %p80
      %p83 = scmp.ne.s32.totalorder %s68, %s82
      %p84 = scmp.eq.s32.totalorder %s23, 0
      %p85 = por %p83, %p84
      %s87 = sadd.s32 %s86, 1
      %p90 = scmp.eq.s32.totalorder %s17, 1
      %p91 = scmp.ne.s32.totalorder %s86, %s88
      %p92 = scmp.eq.s32.totalorder %s17, 0
      %p93 = por %p91, %p92
      %p94 = scmp.ne.s32.totalorder %s86, %s88
      %p95 = scmp.eq.s32.totalorder %s22, 1
      %p96 = por %p94, %p95
      %p97 = scmp.ne.s32.totalorder %s88, %s89
      %p98 = scmp.eq.s32.totalorder %s22, 0
      %p99 = por %p97, %p98
      %p100 = scmp.ne.s32.totalorder %s88, %s89
      %p101 = scmp.eq.s32.totalorder %s23, 1
      %p102 = por %p100, %p101
      %p104 = scmp.ne.s32.totalorder %s89, %s103
      %p105 = scmp.eq.s32.totalorder %s23, 0
      %p106 = por %p104, %p105
      %s108 = sadd.s32 %s107, 1
      %p111 = scmp.eq.s32.totalorder %s17, 1
      %p112 = scmp.ne.s32.totalorder %s107, %s109
      %p113 = scmp.eq.s32.totalorder %s17, 0
      %p114 = por %p112, %p113
      %p115 = scmp.ne.s32.totalorder %s107, %s109
      %p116 = scmp.eq.s32.totalorder %s22, 1
      %p117 = por %p115, %p116
      %p118 = scmp.ne.s32.totalorder %s109, %s110
      %p119 = scmp.eq.s32.totalorder %s22, 0
      %p120 = por %p118, %p119
      %p121 = scmp.ne.s32.totalorder %s109, %s110
      %p122 = scmp.eq.s32.totalorder %s23, 1
      %p123 = por %p121, %p122
      %p125 = scmp.ne.s32.totalorder %s110, %s124
      %p126 = scmp.eq.s32.totalorder %s23, 0
      %p127 = por %p125, %p126
      %s128 = ssub.s32 %s24, %s36
      %p129 = scmp.eq.s32.totalorder %s128, 0
      %s131 = sadd.s32 %s130, 1
      %s132 = scalar_select %p129, %s130, %s131
      %p135 = pneg %p129
      %p136 = scmp.eq.s32.totalorder %s17, 1
      %p137 = por %p135, %p136
      %p138 = scmp.ne.s32.totalorder %s130, %s133
      %p139 = scmp.eq.s32.totalorder %s17, 0
      %p140 = por %p138, %p139
      %p141 = scmp.ne.s32.totalorder %s130, %s133
      %p142 = scmp.eq.s32.totalorder %s22, 1
      %p143 = por %p141, %p142
      %p144 = scmp.ne.s32.totalorder %s133, %s134
      %p145 = scmp.eq.s32.totalorder %s22, 0
      %p146 = por %p144, %p145
      %p147 = scmp.ne.s32.totalorder %s133, %s134
      %p148 = scmp.eq.s32.totalorder %s23, 1
      %p149 = por %p147, %p148
      %p151 = scmp.ne.s32.totalorder %s134, %s150
      %p152 = scmp.eq.s32.totalorder %s23, 0
      %p153 = por %p151, %p152
      %p154 = scmp.le.s32.totalorder 1, %s17
      %p155 = scmp.lt.s32.totalorder %s17, 3
      %p156 = pnand %p154, %p155
      %p157 = pneg %p156
      // Predicated region
      $region9: #{tpu_custom_call.1} parent=5 // pred_check
        _
      $region10: #{tpu_custom_call.1} parent=5 // pred_check_branch
        %159 = sbr.rel (%p156) target = $region12
      $region11: #{tpu_custom_call.1} parent=5 // pred_region
        %s160 = ssub.s32 %s17, 1
        // Predicated region
        $region13: #{tpu_custom_call.1} parent=11 // pred_check
          %p161 = pneg %p78
        $region14: #{tpu_custom_call.1} parent=11 // pred_check_branch
          %163 = sbr.rel (%p161) target = $region16
        $region15: #{tpu_custom_call.1} parent=11 // pred_region
          %s165 = ssub.s32 64, 64
          %166 = vsyncadd [#allocation6], %s165
          %s168 = sshll.u32 [#allocation5], 4
          %s169 = int_to_ptr.vmem [resolvable:$true] %s168
          %171 = dma.hbm_to_vmem [thread:$0]  %s1, 64, %s169, [#allocation6]
        $region16: #{tpu_custom_call.1} parent=11 // pred_fallthru
          _
        // Predicated region
        $region17: #{tpu_custom_call.1} parent=11 // pred_check
          %p172 = pneg %p99
        $region18: #{tpu_custom_call.1} parent=11 // pred_check_branch
          %174 = sbr.rel (%p172) target = $region20
        $region19: #{tpu_custom_call.1} parent=11 // pred_region
          _
        $region20: #{tpu_custom_call.1} parent=11 // pred_fallthru
          _
        // Predicated region
        $region21: #{tpu_custom_call.1} parent=11 // pred_check
          %p175 = pneg %p120
        $region22: #{tpu_custom_call.1} parent=11 // pred_check_branch
          %177 = sbr.rel (%p175) target = $region24
        $region23: #{tpu_custom_call.1} parent=11 // pred_region
          _
        $region24: #{tpu_custom_call.1} parent=11 // pred_fallthru
          _
      $region12: #{tpu_custom_call.1} parent=5 // pred_fallthru
        _
      %p178 = scmp.lt.s32.totalorder %s17, 2
      // Predicated region
      $region25: #{tpu_custom_call.1} parent=5 // pred_check
        %p179 = pneg %p178
      $region26: #{tpu_custom_call.1} parent=5 // pred_check_branch
        %181 = sbr.rel (%p179) target = $region28
      $region27: #{tpu_custom_call.1} parent=5 // pred_region
        // Predicated region
        $region29: #{tpu_custom_call.1} parent=27 // pred_check
          %p182 = pneg %p51
        $region30: #{tpu_custom_call.1} parent=27 // pred_check_branch
          %184 = sbr.rel (%p182) target = $region32
        $region31: #{tpu_custom_call.1} parent=27 // pred_region
          %s185 = sand.u32 %s41, 1
          %s186 = scalar_lea.sflag [#allocation3], %s185
          %s187 = sand.u32 %s41, 1
          %s188 = smul.addr %s187, 8
          %s189 = scalar_lea.vmem [#allocation2], %s188
          %s190 = smul.u32 2, %s25
          %s192 = ssub.s32 128, 128
          %193 = vsyncadd %s186, %s192
          %s194 = smul.addr %s24, 2
          %s195 = sadd.s32 %s190, %s194
          %s196 = smul.addr %s195, 64
          %s197 = scalar_lea.hbm %s0, %s196
          %s199 = sshll.u32 %s189, 4
          %s200 = int_to_ptr.vmem [resolvable:$true] %s199
          %202 = dma.hbm_to_vmem [thread:$0]  %s197, 128, %s200, %s186
        $region32: #{tpu_custom_call.1} parent=27 // pred_fallthru
          _
      $region28: #{tpu_custom_call.1} parent=5 // pred_fallthru
        _
      %p203 = scmp.le.s32.totalorder 1, %s17
      %p204 = scmp.lt.s32.totalorder %s17, 3
      %p205 = pnand %p203, %p204
      %p206 = pneg %p205
      // Predicated region
      $region33: #{tpu_custom_call.1} parent=5 // pred_check
        _
      $region34: #{tpu_custom_call.1} parent=5 // pred_check_branch
        %208 = sbr.rel (%p205) target = $region36
      $region35: #{tpu_custom_call.1} parent=5 // pred_region
        %s209 = ssub.s32 %s17, 1
        %s210 = sand.u32 %s44, 1
        %s211 = scalar_lea.sflag [#allocation3], %s210
        %s212 = sand.u32 %s44, 1
        %s213 = smul.addr %s212, 8
        %s214 = scalar_lea.vmem [#allocation2], %s213
        // Predicated region
        $region37: #{tpu_custom_call.1} parent=35 // pred_check
          %p215 = pneg %p57
        $region38: #{tpu_custom_call.1} parent=35 // pred_check_branch
          %217 = sbr.rel (%p215) target = $region40
        $region39: #{tpu_custom_call.1} parent=35 // pred_region
          %218 = dma.done %s211, 128
        $region40: #{tpu_custom_call.1} parent=35 // pred_fallthru
          _
        // Predicated region
        $region41: #{tpu_custom_call.1} parent=35 // pred_check
          %p219 = pneg %p78
        $region42: #{tpu_custom_call.1} parent=35 // pred_check_branch
          %221 = sbr.rel (%p219) target = $region44
        $region43: #{tpu_custom_call.1} parent=35 // pred_region
          %222 = dma.done [#allocation6], 64
        $region44: #{tpu_custom_call.1} parent=35 // pred_fallthru
          _
        %s223 = sand.u32 %s44, 1
        %s224 = scalar_lea.sflag [#allocation3], %s223
        %s225 = sand.u32 %s44, 1
        %s226 = smul.addr %s225, 8
        %s227 = scalar_lea.vmem [#allocation2], %s226
        %p228 = pneg %p57
        %p229 = pneg %p54
        %p230 = pneg %p78
        %p231 = pneg %p75
        %p232 = pneg %p99
        %p233 = pneg %p96
        %p234 = pneg %p120
        %p235 = pneg %p117
        %p236 = pneg %p146
        %p237 = pneg %p143
        %s238 = sand.u32 %s133, 1
        %s239 = scalar_lea.sflag [#allocation4], %s238
        %s240 = sand.u32 %s133, 1
        %s241 = scalar_lea.vmem [#allocation7], %s240
        %s242 = smul.u32 2, %s27
        %v243 = vld [vmem:[%s214] sm:$0xff]
        %v245 = vcombine.high %v243, %v243
        %vm247 = vcmask 1043456
        %v248 = vsel %vm247, %v243, 0.0
        %v249 = vsel %vm247, %v245, 0.0
        %v250 = vadd.f32 %v248, %v249
        %251 = vadd.xlane.f32.xlu0 %v250
        %v252 = vpop.xlane.xlu0 %251
        %v253 = vmul.f32 %v252, 0.00390625
        %v254 = vld [vmem:[#allocation5] sm:$0xf]
        %v256 = vlaneseq
        %v257 = vand.u32 %v256, 127
        %v258 = vlaneseq
        %v259 = vshrl.u32 %v258, 7
        %v260 = vsub.s32 %v257, %v259
        %v261 = vrot.slane %v253, %v260
        %vm262 = vcmask 31744
        %v263 = vsel %vm262, %v261, 0
        %v266 = vsel %vm247, %v254, 0
        %268 = vmatprep.subr.mxu0 0.0
        %269 = vmatpush1.msra.mxu0 %v266
        %270 = vmatprep.subr.mxu0 0.0
        %271 = vmatpush1.msra.mxu0 0.0
        %272 = vmatprep.subr.mxu0 0.0
        %273 = vmatpush1.msra.mxu0 0.0
        %274 = vmatprep.subr.mxu0 0.0
        %275 = vmatpush1.msra.mxu0 0.0
        %276 = vmatprep.subr.mxu0 0.0
        %277 = vmatpush1.msra.mxu0 0.0
        %278 = vmatprep.subr.mxu0 0.0
        %279 = vmatpush1.msra.mxu0 0.0
        %280 = vmatprep.subr.mxu0 0.0
        %281 = vmatpush1.msra.mxu0 0.0
        %282 = vmatprep.subr.mxu0 0.0
        %283 = vmatpush1.msra.mxu0 0.0
        %284 = vmatprep.subr.mxu0 0.0
        %285 = vmatpush1.msra.mxu0 0.0
        %286 = vmatprep.subr.mxu0 0.0
        %287 = vmatpush1.msra.mxu0 0.0
        %288 = vmatprep.subr.mxu0 0.0
        %289 = vmatpush1.msra.mxu0 0.0
        %290 = vmatprep.subr.mxu0 0.0
        %291 = vmatpush1.msra.mxu0 0.0
        %292 = vmatprep.subr.mxu0 0.0
        %293 = vmatpush1.msra.mxu0 0.0
        %294 = vmatprep.subr.mxu0 0.0
        %295 = vmatpush1.msra.mxu0 0.0
        %296 = vmatprep.subr.mxu0 0.0
        %297 = vmatpush1.msra.mxu0 0.0
        %298 = vmatprep.subr.mxu0 0.0
        %299 = vmatpush1.msra.mxu0 0.0
        %300 = vmatprep.subr.mxu0 0.0
        %301 = vmatpush1.msra.mxu0 0.0
        %302 = vmatprep.subr.mxu0 0.0
        %303 = vmatpush1.msra.mxu0 0.0
        %304 = vmatprep.subr.mxu0 0.0
        %305 = vmatpush1.msra.mxu0 0.0
        %306 = vmatprep.subr.mxu0 0.0
        %307 = vmatpush1.msra.mxu0 0.0
        %308 = vmatprep.subr.mxu0 0.0
        %309 = vmatpush1.msra.mxu0 0.0
        %310 = vmatprep.subr.mxu0 0.0
        %311 = vmatpush1.msra.mxu0 0.0
        %312 = vmatprep.subr.mxu0 0.0
        %313 = vmatpush1.msra.mxu0 0.0
        %314 = vmatprep.subr.mxu0 0.0
        %315 = vmatpush1.msra.mxu0 0.0
        %316 = vmatprep.subr.mxu0 0.0
        %317 = vmatpush1.msra.mxu0 0.0
        %318 = vmatprep.subr.mxu0 0.0
        %319 = vmatpush1.msra.mxu0 0.0
        %320 = vmatprep.subr.mxu0 0.0
        %321 = vmatpush1.msra.mxu0 0.0
        %322 = vmatprep.subr.mxu0 0.0
        %323 = vmatpush1.msra.mxu0 0.0
        %324 = vmatprep.subr.mxu0 0.0
        %325 = vmatpush1.msra.mxu0 0.0
        %326 = vmatprep.subr.mxu0 0.0
        %327 = vmatpush1.msra.mxu0 0.0
        %328 = vmatprep.subr.mxu0 0.0
        %329 = vmatpush1.msra.mxu0 0.0
        %330 = vmatprep.subr.mxu0 0.0
        %331 = vmatpush1.msra.mxu0 0.0
        %332 = vmatprep.mubr.f32.mxu0 0.0
        %333 = vmatmul.mubr.f32.gmra.mrb[0].mxu0 %v263
        %v334 = vpop.f32.mrb[0].mxu0
        %v335 = vadd.f32 0.0, %v334
        %v336 = vpop.f32.mrb[0].mxu0
        %337 = vdwg.mxu0
        %v338 = vmax.f32 %v335, 0.0
        %v339 = vld [vmem:[%s2] sm:$0xf]
        %v340 = vld [vmem:[%s3] sm:$0x1]
        %v342 = vsel %vm262, %v338, 0
        %v345 = vsel %vm247, %v339, 0
        %347 = vmatprep.subr.mxu0 0.0
        %348 = vmatpush1.msra.mxu0 %v345
        %349 = vmatprep.subr.mxu0 0.0
        %350 = vmatpush1.msra.mxu0 0.0
        %351 = vmatprep.subr.mxu0 0.0
        %352 = vmatpush1.msra.mxu0 0.0
        %353 = vmatprep.subr.mxu0 0.0
        %354 = vmatpush1.msra.mxu0 0.0
        %355 = vmatprep.subr.mxu0 0.0
        %356 = vmatpush1.msra.mxu0 0.0
        %357 = vmatprep.subr.mxu0 0.0
        %358 = vmatpush1.msra.mxu0 0.0
        %359 = vmatprep.subr.mxu0 0.0
        %360 = vmatpush1.msra.mxu0 0.0
        %361 = vmatprep.subr.mxu0 0.0
        %362 = vmatpush1.msra.mxu0 0.0
        %363 = vmatprep.subr.mxu0 0.0
        %364 = vmatpush1.msra.mxu0 0.0
        %365 = vmatprep.subr.mxu0 0.0
        %366 = vmatpush1.msra.mxu0 0.0
        %367 = vmatprep.subr.mxu0 0.0
        %368 = vmatpush1.msra.mxu0 0.0
        %369 = vmatprep.subr.mxu0 0.0
        %370 = vmatpush1.msra.mxu0 0.0
        %371 = vmatprep.subr.mxu0 0.0
        %372 = vmatpush1.msra.mxu0 0.0
        %373 = vmatprep.subr.mxu0 0.0
        %374 = vmatpush1.msra.mxu0 0.0
        %375 = vmatprep.subr.mxu0 0.0
        %376 = vmatpush1.msra.mxu0 0.0
        %377 = vmatprep.subr.mxu0 0.0
        %378 = vmatpush1.msra.mxu0 0.0
        %379 = vmatprep.subr.mxu0 0.0
        %380 = vmatpush1.msra.mxu0 0.0
        %381 = vmatprep.subr.mxu0 0.0
        %382 = vmatpush1.msra.mxu0 0.0
        %383 = vmatprep.subr.mxu0 0.0
        %384 = vmatpush1.msra.mxu0 0.0
        %385 = vmatprep.subr.mxu0 0.0
        %386 = vmatpush1.msra.mxu0 0.0
        %387 = vmatprep.subr.mxu0 0.0
        %388 = vmatpush1.msra.mxu0 0.0
        %389 = vmatprep.subr.mxu0 0.0
        %390 = vmatpush1.msra.mxu0 0.0
        %391 = vmatprep.subr.mxu0 0.0
        %392 = vmatpush1.msra.mxu0 0.0
        %393 = vmatprep.subr.mxu0 0.0
        %394 = vmatpush1.msra.mxu0 0.0
        %395 = vmatprep.subr.mxu0 0.0
        %396 = vmatpush1.msra.mxu0 0.0
        %397 = vmatprep.subr.mxu0 0.0
        %398 = vmatpush1.msra.mxu0 0.0
        %399 = vmatprep.subr.mxu0 0.0
        %400 = vmatpush1.msra.mxu0 0.0
        %401 = vmatprep.subr.mxu0 0.0
        %402 = vmatpush1.msra.mxu0 0.0
        %403 = vmatprep.subr.mxu0 0.0
        %404 = vmatpush1.msra.mxu0 0.0
        %405 = vmatprep.subr.mxu0 0.0
        %406 = vmatpush1.msra.mxu0 0.0
        %407 = vmatprep.subr.mxu0 0.0
        %408 = vmatpush1.msra.mxu0 0.0
        %409 = vmatprep.subr.mxu0 0.0
        %410 = vmatpush1.msra.mxu0 0.0
        %411 = vmatprep.mubr.f32.mxu0 0.0
        %412 = vmatmul.mubr.f32.gmra.mrb[0].mxu0 %v342
        %v413 = vpop.f32.mrb[0].mxu0
        %v414 = vadd.f32 %v340, %v413
        %v415 = vpop.f32.mrb[0].mxu0
        %416 = vdwg.mxu0
        %vm417 = vcmask 57344
        %418 = vst.msk [vmem:[%s241] sm:$0x1] %vm417, %v414
        %s419 = sand.u32 %s133, 1
        %s420 = scalar_lea.sflag [#allocation4], %s419
        %s421 = sand.u32 %s133, 1
        %s422 = scalar_lea.vmem [#allocation7], %s421
        // Predicated region
        $region45: #{tpu_custom_call.1} parent=35 // pred_check
          %p423 = pneg %p143
        $region46: #{tpu_custom_call.1} parent=35 // pred_check_branch
          %425 = sbr.rel (%p423) target = $region48
        $region47: #{tpu_custom_call.1} parent=35 // pred_region
          %s427 = ssub.s32 16, 16
          %428 = vsyncadd %s420, %s427
          %s429 = smul.addr %s26, 16
          %s430 = scalar_lea.hbm %s4, %s429
          %s432 = sshll.u32 %s422, 4
          %s433 = int_to_ptr.vmem [resolvable:$true] %s432
          %435 = dma.vmem_to_hbm [thread:$0]  %s433, 16, %s430, %s420
        $region48: #{tpu_custom_call.1} parent=35 // pred_fallthru
          _
      $region36: #{tpu_custom_call.1} parent=5 // pred_fallthru
        _
      %p436 = scmp.le.s32.totalorder 2, %s17
      // Predicated region
      $region49: #{tpu_custom_call.1} parent=5 // pred_check
        %p437 = pneg %p436
      $region50: #{tpu_custom_call.1} parent=5 // pred_check_branch
        %439 = sbr.rel (%p437) target = $region52
      $region51: #{tpu_custom_call.1} parent=5 // pred_region
        %s440 = ssub.s32 %s17, 2
        // Predicated region
        $region53: #{tpu_custom_call.1} parent=51 // pred_check
          %p441 = pneg %p149
        $region54: #{tpu_custom_call.1} parent=51 // pred_check_branch
          %443 = sbr.rel (%p441) target = $region56
        $region55: #{tpu_custom_call.1} parent=51 // pred_region
          %s444 = sand.u32 %s134, 1
          %s445 = scalar_lea.sflag [#allocation4], %s444
          %s446 = sand.u32 %s134, 1
          %s447 = scalar_lea.vmem [#allocation7], %s446
          %448 = dma.done %s445, 16
        $region56: #{tpu_custom_call.1} parent=51 // pred_fallthru
          _
      $region52: #{tpu_custom_call.1} parent=5 // pred_fallthru
        _
    $region6: #{tpu_custom_call.1} parent=1 // loop_footer
      %s21 = sadd.s32 1, %s17
    $region7: #{tpu_custom_call.1} parent=1 // loop_footer_branch
      %16 = sbr.rel target = $region3
    $region8: #{tpu_custom_call.1} parent=1 // loop_exit
      _
    %449 = vsyncpa [#allocation3], 1
    %s450 = scalar_lea.sflag [#allocation3], 1
    %451 = vsyncpa %s450, 1
    %452 = vsyncpa [#allocation6], 1
    %453 = vsyncpa [#allocation4], 1
    %s454 = scalar_lea.sflag [#allocation4], 1
    %455 = vsyncpa %s454, 1

</llo_original>
